<compile_context>
chip_gen: v7x
topology: tpu7x:2x2x1
jax: 0.10.0
libtpu: 0.0.40
codegen_flags: <defaults>
</compile_context>

<pallas_src>
import jax
import jax.numpy as jnp
from jax.experimental import pallas as pl
from jax.experimental.pallas import tpu as pltpu


def _round_up(x: int, m: int) -> int:
    return ((x + m - 1) // m) * m


def _pad_to(arr, shape):
    pads = [(0, s - a) for a, s in zip(arr.shape, shape)]
    if all(p == (0, 0) for p in pads):
        return arr
    return jnp.pad(arr, pads)


def f1_kernel(x_ref, w0_ref, b0_ref, w1_ref, b1_ref, o_ref):
    # x, W0, W1 arrive pre-cast to bf16; both matmuls accumulate in f32 on the
    # MXU. Bias-add + relu run in f32 on the VPU (keeps v5e happy too).
    h = jnp.dot(x_ref[...], w0_ref[...],
                preferred_element_type=jnp.float32)          # (tm, h_pad) f32
    h = jnp.maximum(h + b0_ref[...], 0.0)
    out = jnp.dot(h.astype(w1_ref.dtype), w1_ref[...],
                  preferred_element_type=jnp.float32)        # (tm, k_pad) f32
    o_ref[...] = out + b1_ref[...]                           # lane-dense store


def prepare_f1_params(w0, b0, w1, b1, mxu_dtype=jnp.bfloat16):
    """Pad lane dims to 128 and cast weights to bf16 ONCE (init-time)."""
    d, h = w0.shape
    k = w1.shape[1]
    h_pad = _round_up(h, 128)
    k_pad = _round_up(k, 128)
    w0_p = _pad_to(w0.astype(mxu_dtype), (d, h_pad))
    b0_p = _pad_to(b0.astype(jnp.float32).reshape(1, h), (1, h_pad))
    w1_p = _pad_to(w1.astype(mxu_dtype), (h_pad, k_pad))
    b1_p = _pad_to(b1.astype(jnp.float32).reshape(1, k), (1, k_pad))
    return (w0_p, b0_p, w1_p, b1_p), (h, k)


def _choose_tm(n: int):
    """Pick (tm, n_pad): big tiles for the HBM roofline, minimal batch padding
    waste, and >= 2 grid steps whenever possible so v7x megacore has work for
    both TensorCores (costs nothing on single-TC v5e/v6e)."""
    n8 = max(_round_up(n, 8), 8)
    if n8 <= 8:
        return 8, 8
    best = None
    for t in (1024, 512, 256, 128, 64, 32, 16, 8):
        n_pad = _round_up(n8, t)
        steps = n_pad // t
        if steps < 2:
            continue
        # total padded rows of work + per-step pipeline overhead proxy,
        # tie-broken by padding waste then by preferring the bigger tile.
        score = (n_pad + 256 * steps, n_pad - n8, -t)
        if best is None or score < best[0]:
            best = (score, t, n_pad)
    return best[1], best[2]


def f1_forward(x, params, hk, *, mxu_dtype=jnp.bfloat16):
    w0_p, b0_p, w1_p, b1_p = params
    h, k = hk
    n, d = x.shape
    h_pad = w0_p.shape[1]
    k_pad = w1_p.shape[1]

    tm, n_pad = _choose_tm(n)
    # Cast fused into the pad: halves the per-tile x read from HBM.
    x_p = _pad_to(x.astype(mxu_dtype), (n_pad, d))

    grid = (n_pad // tm,)

    # VMEM budget: double-buffered x/out tiles + resident weights/biases
    # (double-buffer allocation) + f32 hidden intermediate + headroom.
    bf, f32 = 2, 4
    vmem_est = (2 * (tm * d * bf + tm * k_pad * f32)
                + 2 * (d * h_pad * bf + h_pad * k_pad * bf
                       + h_pad * f32 + k_pad * f32)
                + tm * h_pad * f32 + (2 << 20))
    vmem_limit = int(min(max(vmem_est, 4 << 20), 64 << 20))

    cost = pl.CostEstimate(
        flops=2 * n_pad * d * h_pad + 2 * n_pad * h_pad * k_pad,
        transcendentals=0,
        bytes_accessed=(bf * n_pad * d + bf * d * h_pad + f32 * h_pad
                        + bf * h_pad * k_pad + f32 * k_pad
                        + f32 * n_pad * k_pad),
    )

    out_p = pl.pallas_call(
        f1_kernel,
        out_shape=jax.ShapeDtypeStruct((n_pad, k_pad), jnp.float32),
        grid_spec=pl.GridSpec(
            grid=grid,
            in_specs=[
                # x: one (tm, d) bf16 row-tile per grid step.
                pl.BlockSpec((tm, d), lambda i: (i, 0)),
                # Weights / biases: same block every step -> fetched once,
                # VMEM-resident across the batch grid.
                pl.BlockSpec((d, h_pad), lambda i: (0, 0)),
                pl.BlockSpec((1, h_pad), lambda i: (0, 0)),
                pl.BlockSpec((h_pad, k_pad), lambda i: (0, 0)),
                pl.BlockSpec((1, k_pad), lambda i: (0, 0)),
            ],
            out_specs=pl.BlockSpec((tm, k_pad), lambda i: (i, 0)),
        ),
        compiler_params=pltpu.CompilerParams(
            dimension_semantics=("parallel",),
            vmem_limit_bytes=vmem_limit),
        cost_estimate=cost,
    )(x_p, w0_p, b0_p, w1_p, b1_p)

    # NOTE: padded rows/cols of out_p hold junk (relu(b0) @ W1 + b1); always
    # slice before consuming.
    return out_p[:n, :k]


if __name__ == "__main__":
    # Small, MNIST-like-but-tiny F1 shapes: n=8 samples, d=64 features,
    # h=32 hidden units, k=10 classes.
    n, d, h, k = 8, 64, 32, 10

    key = jax.random.PRNGKey(0)
    kx, kw0, kb0, kw1, kb1 = jax.random.split(key, 5)

    # Deterministic init mirroring LinearLayer: Uniform(-alpha, alpha),
    # alpha = 1/sqrt(dim_in).
    a0 = 1.0 / (d ** 0.5)
    a1 = 1.0 / (h ** 0.5)
    x = jax.random.normal(kx, (n, d), dtype=jnp.float32)
    w0 = jax.random.uniform(kw0, (d, h), minval=-a0, maxval=a0, dtype=jnp.float32)
    b0 = jax.random.uniform(kb0, (h,), minval=-a0, maxval=a0, dtype=jnp.float32)
    w1 = jax.random.uniform(kw1, (h, k), minval=-a1, maxval=a1, dtype=jnp.float32)
    b1 = jax.random.uniform(kb1, (k,), minval=-a1, maxval=a1, dtype=jnp.float32)

    # Pad/cast the parameters once (init-time), then run the forward.
    params, hk = prepare_f1_params(w0, b0, w1, b1)
    params = jax.tree_util.tree_map(jax.block_until_ready, params)

    out = f1_forward(x, params, hk)
    jax.block_until_ready(out)
    assert out.shape == (n, k)

    # Reference with matching MXU precision (bf16 operands, f32 accumulation).
    bf16 = jnp.bfloat16
    h_ref = jnp.dot(x.astype(bf16), w0.astype(bf16),
                    preferred_element_type=jnp.float32) + b0
    h_ref = jnp.maximum(h_ref, 0.0)
    ref_bf16 = jnp.dot(h_ref.astype(bf16), w1.astype(bf16),
                       preferred_element_type=jnp.float32) + b1
    assert jnp.allclose(out, ref_bf16, atol=1e-2, rtol=1e-2)

    # Loose sanity check against the pure-f32 forward (bf16 rounding only).
    ref_f32 = jnp.maximum(x @ w0 + b0, 0.0) @ w1 + b1
    assert jnp.allclose(out, ref_f32, atol=5e-2, rtol=5e-2)

    print("KERNEL_OK")
</pallas_src>

<mosaic_0001>
module attributes {stable_mosaic.version = 11 : i64} {
  func.func @f1_kernel(%arg0: i32, %arg1: memref<8x64xbf16, #tpu.memory_space<vmem>>, %arg2: memref<64x128xbf16, #tpu.memory_space<vmem>>, %arg3: memref<1x128xf32, #tpu.memory_space<vmem>>, %arg4: memref<128x128xbf16, #tpu.memory_space<vmem>>, %arg5: memref<1x128xf32, #tpu.memory_space<vmem>>, %arg6: memref<8x128xf32, #tpu.memory_space<vmem>>) attributes {dimension_semantics = [#tpu.dimension_semantics<parallel>], iteration_bounds = array<i64: 1>, scalar_prefetch = 0 : i64, scratch_operands = 0 : i64, tpu.core_type = #tpu.core_type<tc>, window_params = [{transform_indices = @transform_0, window_bounds = array<i64: 8, 64>}, {pipeline_mode = #tpu.pipeline_mode<synchronous>, transform_indices = @transform_1, window_bounds = array<i64: 64, 128>}, {pipeline_mode = #tpu.pipeline_mode<synchronous>, transform_indices = @transform_2, window_bounds = array<i64: 1, 128>}, {pipeline_mode = #tpu.pipeline_mode<synchronous>, transform_indices = @transform_3, window_bounds = array<i64: 128, 128>}, {pipeline_mode = #tpu.pipeline_mode<synchronous>, transform_indices = @transform_4, window_bounds = array<i64: 1, 128>}, {transform_indices = @transform_5, window_bounds = array<i64: 8, 128>}]} {
    %c0 = arith.constant 0 : index
    %c0_0 = arith.constant 0 : index
    %0 = vector.load %arg1[%c0, %c0_0] : memref<8x64xbf16, #tpu.memory_space<vmem>>, vector<8x64xbf16>
    %c0_1 = arith.constant 0 : index
    %c0_2 = arith.constant 0 : index
    %1 = vector.load %arg2[%c0_1, %c0_2] : memref<64x128xbf16, #tpu.memory_space<vmem>>, vector<64x128xbf16>
    %cst = arith.constant dense<0.000000e+00> : vector<8x128xf32>
    %2 = tpu.matmul %0, %1, %cst {dimension_numbers = #tpu.dot_dimension_numbers<[1], [0], [0], [1], [0, 0, 1, 1], [], []>} : vector<8x64xbf16>, vector<64x128xbf16>, vector<8x128xf32> -> vector<8x128xf32>
    %c0_3 = arith.constant 0 : index
    %c0_4 = arith.constant 0 : index
    %3 = vector.load %arg3[%c0_3, %c0_4] : memref<1x128xf32, #tpu.memory_space<vmem>>, vector<1x128xf32>
    %4 = vector.broadcast %3 : vector<1x128xf32> to vector<8x128xf32>
    %5 = arith.addf %2, %4 : vector<8x128xf32>
    %cst_5 = arith.constant 0.000000e+00 : f32
    %6 = vector.broadcast %cst_5 : f32 to vector<8x128xf32>
    %7 = arith.maximumf %5, %6 : vector<8x128xf32>
    %8 = arith.truncf %7 : vector<8x128xf32> to vector<8x128xbf16>
    %c0_6 = arith.constant 0 : index
    %c0_7 = arith.constant 0 : index
    %9 = vector.load %arg4[%c0_6, %c0_7] : memref<128x128xbf16, #tpu.memory_space<vmem>>, vector<128x128xbf16>
    %cst_8 = arith.constant dense<0.000000e+00> : vector<8x128xf32>
    %10 = tpu.matmul %8, %9, %cst_8 {dimension_numbers = #tpu.dot_dimension_numbers<[1], [0], [0], [1], [0, 0, 1, 1], [], []>} : vector<8x128xbf16>, vector<128x128xbf16>, vector<8x128xf32> -> vector<8x128xf32>
    %c0_9 = arith.constant 0 : index
    %c0_10 = arith.constant 0 : index
    %11 = vector.load %arg5[%c0_9, %c0_10] : memref<1x128xf32, #tpu.memory_space<vmem>>, vector<1x128xf32>
    %12 = vector.broadcast %11 : vector<1x128xf32> to vector<8x128xf32>
    %13 = arith.addf %10, %12 : vector<8x128xf32>
    %c0_11 = arith.constant 0 : index
    %c0_12 = arith.constant 0 : index
    %14 = vector.load %arg6[%c0_11, %c0_12] : memref<8x128xf32, #tpu.memory_space<vmem>>, vector<8x128xf32>
    tpu.vector_store %arg6[%c0_11, %c0_12], %13 {strides = array<i32>} : memref<8x128xf32, #tpu.memory_space<vmem>>, vector<8x128xf32>,
    return
  }
  func.func @transform_0(%arg0: i32) -> (i32, i32) {
    %c0_i32 = arith.constant 0 : i32
    %c0_i32_0 = arith.constant 0 : i32
    return %arg0, %c0_i32 : i32, i32
  }
  func.func @transform_1(%arg0: i32) -> (i32, i32) {
    %c0_i32 = arith.constant 0 : i32
    %c0_i32_0 = arith.constant 0 : i32
    %c0_i32_1 = arith.constant 0 : i32
    return %c0_i32, %c0_i32_0 : i32, i32
  }
  func.func @transform_2(%arg0: i32) -> (i32, i32) {
    %c0_i32 = arith.constant 0 : i32
    %c0_i32_0 = arith.constant 0 : i32
    %c0_i32_1 = arith.constant 0 : i32
    return %c0_i32, %c0_i32_0 : i32, i32
  }
  func.func @transform_3(%arg0: i32) -> (i32, i32) {
    %c0_i32 = arith.constant 0 : i32
    %c0_i32_0 = arith.constant 0 : i32
    %c0_i32_1 = arith.constant 0 : i32
    return %c0_i32, %c0_i32_0 : i32, i32
  }
  func.func @transform_4(%arg0: i32) -> (i32, i32) {
    %c0_i32 = arith.constant 0 : i32
    %c0_i32_0 = arith.constant 0 : i32
    %c0_i32_1 = arith.constant 0 : i32
    return %c0_i32, %c0_i32_0 : i32, i32
  }
  func.func @transform_5(%arg0: i32) -> (i32, i32) {
    %c0_i32 = arith.constant 0 : i32
    %c0_i32_0 = arith.constant 0 : i32
    return %arg0, %c0_i32 : i32, i32
  }
}

</mosaic_0001>

<llo_original>
// kernel: tpu_custom_call.1
$region0: #{tpu_custom_call.1}
  #allocation0 [shape = 'u32[]', space=smem, size = 0x4, offset = 0x4, fixed_abs, tag = 'smem constant byte address 0x4 - core index']
  #allocation1 [shape = 'u32[144,128]{1,0:T(1,128)}', space=vmem, size = 0x12000, scoped, tag = 'internal scratch']
  %s0 = inlined_call_operand.hbm [shape: bf16[8,64], index: 0, kind: input, shape index: {}]
  %s1 = inlined_call_operand.hbm [shape: bf16[64,128], index: 1, kind: input, shape index: {}]
  %s2 = inlined_call_operand.vmem [shape: f32[1,128], index: 2, kind: input, shape index: {}]
  %s3 = inlined_call_operand.hbm [shape: bf16[128,128], index: 3, kind: input, shape index: {}]
  %s4 = inlined_call_operand.vmem [shape: f32[1,128], index: 4, kind: input, shape index: {}]
  %s5 = inlined_call_operand.hbm [shape: f32[8,128], index: 5, kind: output, shape index: {}]
  %s6 = sld [smem:[#allocation0]]
  $region42: #{tpu_custom_call.1} parent=0
    _
  %s8 = ssub.s32 1, %s6
  %s9 = scalar_select 0, %s8, %s6
  $region1: #{tpu_custom_call.1} parent=0
    #allocation2 [shape = 'u8[2048]{0}', space=vmem, size = 0x800, scoped, tag = 'input window, operand 0, single buffered']
    #allocation3 [shape = 's32[1]{0}', space=sflag, size = 0x4, scoped, tag = 'scoped memory for tpu_custom_call.1']
    #allocation4 [shape = 's32[1]{0}', space=sflag, size = 0x4, scoped, tag = 'scoped memory for tpu_custom_call.1']
    #allocation5 [shape = 'u8[16384]{0}', space=vmem, size = 0x4000, scoped, tag = 'input window, operand 1, single buffered']
    #allocation6 [shape = 's32[1]{0}', space=sflag, size = 0x4, scoped, tag = 'scoped memory for tpu_custom_call.1']
    #allocation7 [shape = 'u8[32768]{0}', space=vmem, size = 0x8000, scoped, tag = 'input window, operand 3, single buffered']
    #allocation8 [shape = 'u8[4096]{0}', space=vmem, size = 0x1000, scoped, tag = 'output window, operand 0, single buffered']
    %10 = vsyncpa [#allocation3], 0
    %11 = vsyncpa [#allocation6], 0
    %12 = vsyncpa [#allocation4], 0
    // Predicated region
    $region2: #{tpu_custom_call.1} parent=1 // pred_check
      _
    $region3: #{tpu_custom_call.1} parent=1 // pred_check_branch
      %14 = sbr.rel (0) target = $region5
    $region4: #{tpu_custom_call.1} parent=1 // pred_region
      %s16 = ssub.s32 64, 64
      %17 = vsyncadd [#allocation3], %s16
      %s19 = sshll.u32 [#allocation2], 4
      %s20 = int_to_ptr.vmem [resolvable:$true] %s19
      %22 = dma.hbm_to_vmem [thread:$0]  %s0, 64, %s20, [#allocation3]
    $region5: #{tpu_custom_call.1} parent=1 // pred_fallthru
      _
    // Predicated region
    $region6: #{tpu_custom_call.1} parent=1 // pred_check
      _
    $region7: #{tpu_custom_call.1} parent=1 // pred_check_branch
      %24 = sbr.rel (0) target = $region9
    $region8: #{tpu_custom_call.1} parent=1 // pred_region
      %s26 = ssub.s32 512, 512
      %27 = vsyncadd [#allocation6], %s26
      %s28 = sshll.u32 [#allocation5], 4
      %s29 = int_to_ptr.vmem [resolvable:$true] %s28
      %34 = dma.hbm_to_vmem [thread:$0]  %s1, 512, %s29, [#allocation6], 64, 64, 4
    $region9: #{tpu_custom_call.1} parent=1 // pred_fallthru
      _
    // Predicated region
    $region10: #{tpu_custom_call.1} parent=1 // pred_check
      _
    $region11: #{tpu_custom_call.1} parent=1 // pred_check_branch
      %36 = sbr.rel (0) target = $region13
    $region12: #{tpu_custom_call.1} parent=1 // pred_region
      _
    $region13: #{tpu_custom_call.1} parent=1 // pred_fallthru
      _
    // Predicated region
    $region14: #{tpu_custom_call.1} parent=1 // pred_check
      _
    $region15: #{tpu_custom_call.1} parent=1 // pred_check_branch
      %38 = sbr.rel (0) target = $region17
    $region16: #{tpu_custom_call.1} parent=1 // pred_region
      %s40 = ssub.s32 1024, 1024
      %41 = vsyncadd [#allocation6], %s40
      %s42 = sshll.u32 [#allocation7], 4
      %s43 = int_to_ptr.vmem [resolvable:$true] %s42
      %48 = dma.hbm_to_vmem [thread:$0]  %s3, 1024, %s43, [#allocation6], 64, 64, 4
    $region17: #{tpu_custom_call.1} parent=1 // pred_fallthru
      _
    // Predicated region
    $region18: #{tpu_custom_call.1} parent=1 // pred_check
      _
    $region19: #{tpu_custom_call.1} parent=1 // pred_check_branch
      %50 = sbr.rel (0) target = $region21
    $region20: #{tpu_custom_call.1} parent=1 // pred_region
      _
    $region21: #{tpu_custom_call.1} parent=1 // pred_fallthru
      _
    // Predicated region
    $region22: #{tpu_custom_call.1} parent=1 // pred_check
      _
    $region23: #{tpu_custom_call.1} parent=1 // pred_check_branch
      %52 = sbr.rel (0) target = $region25
    $region24: #{tpu_custom_call.1} parent=1 // pred_region
      %53 = dma.done [#allocation3], 64
    $region25: #{tpu_custom_call.1} parent=1 // pred_fallthru
      _
    // Predicated region
    $region26: #{tpu_custom_call.1} parent=1 // pred_check
      _
    $region27: #{tpu_custom_call.1} parent=1 // pred_check_branch
      %55 = sbr.rel (0) target = $region29
    $region28: #{tpu_custom_call.1} parent=1 // pred_region
      %56 = dma.done [#allocation6], 512
    $region29: #{tpu_custom_call.1} parent=1 // pred_fallthru
      _
    // Predicated region
    $region30: #{tpu_custom_call.1} parent=1 // pred_check
      _
    $region31: #{tpu_custom_call.1} parent=1 // pred_check_branch
      %58 = sbr.rel (0) target = $region33
    $region32: #{tpu_custom_call.1} parent=1 // pred_region
      %59 = dma.done [#allocation6], 1024
    $region33: #{tpu_custom_call.1} parent=1 // pred_fallthru
      _
    %v61 = vld [vmem:[#allocation2] sm:$0xf]
    %v62 = vld [vmem:[#allocation5] sm:$0xf]
    %v63 = vld [vmem:[#allocation5 + $0x4] sm:$0xf]
    %v64 = vld [vmem:[#allocation5 + $0x8] sm:$0xf]
    %v65 = vld [vmem:[#allocation5 + $0xc] sm:$0xf]
    %v66 = vld [vmem:[#allocation5 + $0x10] sm:$0xf]
    %v67 = vld [vmem:[#allocation5 + $0x14] sm:$0xf]
    %v68 = vld [vmem:[#allocation5 + $0x18] sm:$0xf]
    %v69 = vld [vmem:[#allocation5 + $0x1c] sm:$0xf]
    %v70 = vld [vmem:[%s2] sm:$0x1]
    %v72 = vlaneseq
    %v73 = vshrl.u32 %v72, 7
    %v74 = vsub.s32 0, %v73
    %v75 = vrot.slane %v70, %v74
    %v85 = vunpack.c.l.b16 %v62
    %v86 = vunpack.c.l.b16 %v63
    %v87 = vunpack.c.l.b16 %v64
    %v88 = vunpack.c.l.b16 %v65
    %v89 = vunpack.c.l.b16 %v66
    %v90 = vunpack.c.l.b16 %v67
    %v91 = vunpack.c.l.b16 %v68
    %v92 = vunpack.c.l.b16 %v69
    %v93 = vpack.c.b16 %v86, %v85
    %v94 = vpack.c.b16 %v88, %v87
    %v95 = vpack.c.b16 %v90, %v89
    %v96 = vpack.c.b16 %v92, %v91
    %vm101 = vcmask 523264
    %v103 = vsel %vm101, %v61, 0
    %105 = vmatprep.subr.bf16.mxu0 0
    %106 = vmatpush1.bf16.msra.mxu0 %v93
    %107 = vmatprep.subr.bf16.mxu0 0
    %108 = vmatpush1.bf16.msra.mxu0 %v94
    %109 = vmatprep.subr.bf16.mxu0 0
    %110 = vmatpush1.bf16.msra.mxu0 %v95
    %111 = vmatprep.subr.bf16.mxu0 0
    %112 = vmatpush1.bf16.msra.mxu0 %v96
    %113 = vmatprep.subr.bf16.mxu0 0
    %114 = vmatpush1.bf16.msra.mxu0 0
    %115 = vmatprep.subr.bf16.mxu0 0
    %116 = vmatpush1.bf16.msra.mxu0 0
    %117 = vmatprep.subr.bf16.mxu0 0
    %118 = vmatpush1.bf16.msra.mxu0 0
    %119 = vmatprep.subr.bf16.mxu0 0
    %120 = vmatpush1.bf16.msra.mxu0 0
    %121 = vmatprep.subr.bf16.mxu0 0
    %122 = vmatpush1.bf16.msra.mxu0 0
    %123 = vmatprep.subr.bf16.mxu0 0
    %124 = vmatpush1.bf16.msra.mxu0 0
    %125 = vmatprep.subr.bf16.mxu0 0
    %126 = vmatpush1.bf16.msra.mxu0 0
    %127 = vmatprep.subr.bf16.mxu0 0
    %128 = vmatpush1.bf16.msra.mxu0 0
    %129 = vmatprep.subr.bf16.mxu0 0
    %130 = vmatpush1.bf16.msra.mxu0 0
    %131 = vmatprep.subr.bf16.mxu0 0
    %132 = vmatpush1.bf16.msra.mxu0 0
    %133 = vmatprep.subr.bf16.mxu0 0
    %134 = vmatpush1.bf16.msra.mxu0 0
    %135 = vmatprep.subr.bf16.mxu0 0
    %136 = vmatpush1.bf16.msra.mxu0 0
    %137 = vmatprep.mubr.bf16.mxu0 0
    %138 = vmatmul.mubr.bf16.gmra.mrb[0].mxu0 %v103
    %v139 = vpop.f32.mrb[0].mxu0
    %v140 = vadd.f32 %v75, %v139
    %v141 = vpop.f32.mrb[0].mxu0
    %v142 = vpop.f32.mrb[0].mxu0
    %v143 = vpop.f32.mrb[0].mxu0
    %144 = vdwg.mxu0
    %v145 = vmax.f32 %v140, 0.0
    %v146 = vpack.c.bf16 %v145, %v145
    %v147 = vld [vmem:[#allocation7] sm:$0xf]
    %v148 = vld [vmem:[#allocation7 + $0x4] sm:$0xf]
    %v149 = vld [vmem:[#allocation7 + $0x8] sm:$0xf]
    %v150 = vld [vmem:[#allocation7 + $0xc] sm:$0xf]
    %v151 = vld [vmem:[#allocation7 + $0x10] sm:$0xf]
    %v152 = vld [vmem:[#allocation7 + $0x14] sm:$0xf]
    %v153 = vld [vmem:[#allocation7 + $0x18] sm:$0xf]
    %v154 = vld [vmem:[#allocation7 + $0x1c] sm:$0xf]
    %v155 = vld [vmem:[#allocation7 + $0x20] sm:$0xf]
    %v156 = vld [vmem:[#allocation7 + $0x24] sm:$0xf]
    %v157 = vld [vmem:[#allocation7 + $0x28] sm:$0xf]
    %v158 = vld [vmem:[#allocation7 + $0x2c] sm:$0xf]
    %v159 = vld [vmem:[#allocation7 + $0x30] sm:$0xf]
    %v160 = vld [vmem:[#allocation7 + $0x34] sm:$0xf]
    %v161 = vld [vmem:[#allocation7 + $0x38] sm:$0xf]
    %v162 = vld [vmem:[#allocation7 + $0x3c] sm:$0xf]
    %v163 = vld [vmem:[%s4] sm:$0x1]
    %v165 = vlaneseq
    %v166 = vshrl.u32 %v165, 7
    %v167 = vsub.s32 0, %v166
    %v168 = vrot.slane %v163, %v167
    %v186 = vunpack.c.l.b16 %v147
    %v187 = vunpack.c.l.b16 %v148
    %v188 = vunpack.c.l.b16 %v149
    %v189 = vunpack.c.l.b16 %v150
    %v190 = vunpack.c.l.b16 %v151
    %v191 = vunpack.c.l.b16 %v152
    %v192 = vunpack.c.l.b16 %v153
    %v193 = vunpack.c.l.b16 %v154
    %v194 = vunpack.c.l.b16 %v155
    %v195 = vunpack.c.l.b16 %v156
    %v196 = vunpack.c.l.b16 %v157
    %v197 = vunpack.c.l.b16 %v158
    %v198 = vunpack.c.l.b16 %v159
    %v199 = vunpack.c.l.b16 %v160
    %v200 = vunpack.c.l.b16 %v161
    %v201 = vunpack.c.l.b16 %v162
    %v202 = vpack.c.b16 %v187, %v186
    %v203 = vpack.c.b16 %v189, %v188
    %v204 = vpack.c.b16 %v191, %v190
    %v205 = vpack.c.b16 %v193, %v192
    %v206 = vpack.c.b16 %v195, %v194
    %v207 = vpack.c.b16 %v197, %v196
    %v208 = vpack.c.b16 %v199, %v198
    %v209 = vpack.c.b16 %v201, %v200
    %218 = vmatprep.subr.bf16.mxu0 0
    %219 = vmatpush1.bf16.msra.mxu0 %v202
    %220 = vmatprep.subr.bf16.mxu0 0
    %221 = vmatpush1.bf16.msra.mxu0 %v203
    %222 = vmatprep.subr.bf16.mxu0 0
    %223 = vmatpush1.bf16.msra.mxu0 %v204
    %224 = vmatprep.subr.bf16.mxu0 0
    %225 = vmatpush1.bf16.msra.mxu0 %v205
    %226 = vmatprep.subr.bf16.mxu0 0
    %227 = vmatpush1.bf16.msra.mxu0 %v206
    %228 = vmatprep.subr.bf16.mxu0 0
    %229 = vmatpush1.bf16.msra.mxu0 %v207
    %230 = vmatprep.subr.bf16.mxu0 0
    %231 = vmatpush1.bf16.msra.mxu0 %v208
    %232 = vmatprep.subr.bf16.mxu0 0
    %233 = vmatpush1.bf16.msra.mxu0 %v209
    %234 = vmatprep.subr.bf16.mxu0 0
    %235 = vmatpush1.bf16.msra.mxu0 0
    %236 = vmatprep.subr.bf16.mxu0 0
    %237 = vmatpush1.bf16.msra.mxu0 0
    %238 = vmatprep.subr.bf16.mxu0 0
    %239 = vmatpush1.bf16.msra.mxu0 0
    %240 = vmatprep.subr.bf16.mxu0 0
    %241 = vmatpush1.bf16.msra.mxu0 0
    %242 = vmatprep.subr.bf16.mxu0 0
    %243 = vmatpush1.bf16.msra.mxu0 0
    %244 = vmatprep.subr.bf16.mxu0 0
    %245 = vmatpush1.bf16.msra.mxu0 0
    %246 = vmatprep.subr.bf16.mxu0 0
    %247 = vmatpush1.bf16.msra.mxu0 0
    %248 = vmatprep.subr.bf16.mxu0 0
    %249 = vmatpush1.bf16.msra.mxu0 0
    %250 = vmatprep.mubr.bf16.mxu0 0
    %251 = vmatmul.mubr.bf16.gmra.mrb[0].mxu0 %v146
    %v252 = vpop.f32.mrb[0].mxu0
    %v253 = vadd.f32 %v168, %v252
    %v254 = vpop.f32.mrb[0].mxu0
    %v255 = vpop.f32.mrb[0].mxu0
    %v256 = vpop.f32.mrb[0].mxu0
    %257 = vdwg.mxu0
    %258 = vst [vmem:[#allocation8] sm:$0xff] %v253
    // Predicated region
    $region34: #{tpu_custom_call.1} parent=1 // pred_check
      _
    $region35: #{tpu_custom_call.1} parent=1 // pred_check_branch
      %260 = sbr.rel (0) target = $region37
    $region36: #{tpu_custom_call.1} parent=1 // pred_region
      %s262 = ssub.s32 128, 128
      %263 = vsyncadd [#allocation4], %s262
      %s265 = sshll.u32 [#allocation8], 4
      %s266 = int_to_ptr.vmem [resolvable:$true] %s265
      %268 = dma.vmem_to_hbm [thread:$0]  %s266, 128, %s5, [#allocation4]
    $region37: #{tpu_custom_call.1} parent=1 // pred_fallthru
      _
    // Predicated region
    $region38: #{tpu_custom_call.1} parent=1 // pred_check
      _
    $region39: #{tpu_custom_call.1} parent=1 // pred_check_branch
      %270 = sbr.rel (0) target = $region41
    $region40: #{tpu_custom_call.1} parent=1 // pred_region
      %271 = dma.done [#allocation4], 128
    $region41: #{tpu_custom_call.1} parent=1 // pred_fallthru
      _
    %272 = vsyncpa [#allocation3], 1
    %273 = vsyncpa [#allocation6], 1
    %274 = vsyncpa [#allocation4], 1

</llo_original>
